<compile_context>
chip_gen: v7x
topology: tpu7x:2x2x1
jax: 0.10.0
libtpu: 0.0.40
codegen_flags: <defaults>
</compile_context>

<pallas_src>
import functools

import jax
import jax.numpy as jnp
from jax.experimental import pallas as pl
from jax.experimental.pallas import tpu as pltpu

LANE = 128          # lane-dense padded feature width
IN_FEAT = 100       # logical input features
OUT_FEAT = 2        # logical output features


def _xk_kernel(x_ref,
               w0_ref, b0_ref,
               w1_ref, b1_ref,
               w2_ref, b2_ref,
               w3_ref, b3_ref,
               w4_ref, b4_ref,
               out_ref):
    """One batch tile through the whole MLP. All operands are lane-dense 128-wide.

    x / W are bf16 (MXU native); accumulation is f32 via preferred_element_type;
    bias add + ReLU run in f32 on the VPU, then re-cast to bf16 for the next MXU pass.
    """
    h = x_ref[...]                                            # (TB, 128) bf16

    # input (100 -> 100) + ReLU
    h = jnp.dot(h, w0_ref[...], preferred_element_type=jnp.float32) + b0_ref[...]
    h = jnp.maximum(h, 0.0).astype(jnp.bfloat16)

    # fc1 (100 -> 100) + ReLU
    h = jnp.dot(h, w1_ref[...], preferred_element_type=jnp.float32) + b1_ref[...]
    h = jnp.maximum(h, 0.0).astype(jnp.bfloat16)

    # fc2 (100 -> 100) + ReLU
    h = jnp.dot(h, w2_ref[...], preferred_element_type=jnp.float32) + b2_ref[...]
    h = jnp.maximum(h, 0.0).astype(jnp.bfloat16)

    # fc3 (100 -> 100) + ReLU
    h = jnp.dot(h, w3_ref[...], preferred_element_type=jnp.float32) + b3_ref[...]
    h = jnp.maximum(h, 0.0).astype(jnp.bfloat16)

    # output (100 -> 2), padded to 128 lanes; no activation. Unmasked 128-wide store.
    y = jnp.dot(h, w4_ref[...], preferred_element_type=jnp.float32) + b4_ref[...]
    out_ref[...] = y.astype(out_ref.dtype)                    # (TB, 128) f32


def _round_up(n, m):
    return (n + m - 1) // m * m


def _pad_params(params):
    """Zero-pad weights/biases to (128,128)/(1,128); weights cast once to bf16."""
    flat = []
    for w, b in params:
        fin, fout = w.shape
        w_p = jnp.zeros((LANE, LANE), jnp.float32).at[:fin, :fout].set(w)
        b_p = jnp.zeros((1, LANE), jnp.float32).at[:, :fout].set(b.reshape(1, -1))
        flat.extend([w_p.astype(jnp.bfloat16), b_p])          # bias stays f32
    return flat


@functools.partial(jax.jit, static_argnames=("tb",))
def xk_forward(x, params, tb=512):
    """params = [(W, b), ...] with W: (in, out), b: (1, out) or (out,)."""
    B = x.shape[0]

    # Batch tile: cap at `tb` rows (sized well under v7x's 32 MiB scoped VMEM:
    # 2 bufs x 512 x 128 x (2B in + 4B out) + ~80 KiB resident weights << 1 MiB),
    # pad B so the grid divides evenly.
    TB = tb if B >= tb else _round_up(B, 8)
    B_pad = _round_up(B, TB)

    # Lane-dense, bf16 input tile (zero-padded rows/lanes).
    x_p = jnp.zeros((B_pad, LANE), jnp.bfloat16).at[:B, :IN_FEAT].set(
        x.astype(jnp.bfloat16))

    flat = _pad_params(params)

    x_spec = pl.BlockSpec((TB, LANE), lambda i: (i, 0))
    w_spec = pl.BlockSpec((LANE, LANE), lambda i: (0, 0))   # resident across steps
    b_spec = pl.BlockSpec((1, LANE), lambda i: (0, 0))      # resident across steps
    in_specs = [x_spec]
    for _ in params:
        in_specs.extend([w_spec, b_spec])

    out = pl.pallas_call(
        _xk_kernel,
        out_shape=jax.ShapeDtypeStruct((B_pad, LANE), jnp.float32),
        grid_spec=pltpu.PrefetchScalarGridSpec(
            num_scalar_prefetch=0,
            grid=(B_pad // TB,),
            in_specs=in_specs,
            out_specs=pl.BlockSpec((TB, LANE), lambda i: (i, 0)),
        ),
        compiler_params=pltpu.CompilerParams(
            dimension_semantics=("parallel",)),   # megacore sharding on v7x
    )(x_p, *flat)

    # Free XLA slice back to the logical (B, 2) output.
    return out[:B, :OUT_FEAT]


def init_params(key):
    """Deterministic synthetic init matching the PyTorch module's shapes."""
    dims = [(100, 100), (100, 100), (100, 100), (100, 100), (100, 2)]
    params = []
    for (fan_in, fan_out) in dims:
        key, kw, kb = jax.random.split(key, 3)
        bound = 1.0 / jnp.sqrt(fan_in)
        w = jax.random.uniform(kw, (fan_in, fan_out), jnp.float32, -bound, bound)
        b = jax.random.uniform(kb, (1, fan_out), jnp.float32, -bound, bound)
        params.append((w, b))
    return params


def reference_forward(x, params):
    """Pure f32 reference (matches the PyTorch forward)."""
    h = x
    for i, (w, b) in enumerate(params):
        h = h @ w + b.reshape(1, -1)
        if i < len(params) - 1:
            h = jnp.maximum(h, 0.0)
    return h


if __name__ == "__main__":
    key = jax.random.PRNGKey(0)
    key, kx = jax.random.split(key)

    batch = 8
    x = jax.random.normal(kx, (batch, IN_FEAT), jnp.float32)

    params = init_params(key)

    out = xk_forward(x, params)
    out = jax.block_until_ready(out)

    ref = reference_forward(x, params)
    assert out.shape == (batch, OUT_FEAT), out.shape
    # bf16 operands into the MXU (f32 accumulation) -> allow bf16-level rounding.
    assert jnp.allclose(out, ref, atol=3e-2, rtol=3e-2), "mismatch vs reference"

    print("KERNEL_OK")
</pallas_src>

<mosaic_0001>
module attributes {stable_mosaic.version = 11 : i64} {
  func.func @_xk_kernel(%arg0: i32, %arg1: memref<8x128xbf16, #tpu.memory_space<vmem>>, %arg2: memref<128x128xbf16, #tpu.memory_space<vmem>>, %arg3: memref<1x128xf32, #tpu.memory_space<vmem>>, %arg4: memref<128x128xbf16, #tpu.memory_space<vmem>>, %arg5: memref<1x128xf32, #tpu.memory_space<vmem>>, %arg6: memref<128x128xbf16, #tpu.memory_space<vmem>>, %arg7: memref<1x128xf32, #tpu.memory_space<vmem>>, %arg8: memref<128x128xbf16, #tpu.memory_space<vmem>>, %arg9: memref<1x128xf32, #tpu.memory_space<vmem>>, %arg10: memref<128x128xbf16, #tpu.memory_space<vmem>>, %arg11: memref<1x128xf32, #tpu.memory_space<vmem>>, %arg12: memref<8x128xf32, #tpu.memory_space<vmem>>) attributes {dimension_semantics = [#tpu.dimension_semantics<parallel>], iteration_bounds = array<i64: 1>, scalar_prefetch = 0 : i64, scratch_operands = 0 : i64, tpu.core_type = #tpu.core_type<tc>, window_params = [{transform_indices = @transform_0, window_bounds = array<i64: 8, 128>}, {pipeline_mode = #tpu.pipeline_mode<synchronous>, transform_indices = @transform_1, window_bounds = array<i64: 128, 128>}, {pipeline_mode = #tpu.pipeline_mode<synchronous>, transform_indices = @transform_2, window_bounds = array<i64: 1, 128>}, {pipeline_mode = #tpu.pipeline_mode<synchronous>, transform_indices = @transform_3, window_bounds = array<i64: 128, 128>}, {pipeline_mode = #tpu.pipeline_mode<synchronous>, transform_indices = @transform_4, window_bounds = array<i64: 1, 128>}, {pipeline_mode = #tpu.pipeline_mode<synchronous>, transform_indices = @transform_5, window_bounds = array<i64: 128, 128>}, {pipeline_mode = #tpu.pipeline_mode<synchronous>, transform_indices = @transform_6, window_bounds = array<i64: 1, 128>}, {pipeline_mode = #tpu.pipeline_mode<synchronous>, transform_indices = @transform_7, window_bounds = array<i64: 128, 128>}, {pipeline_mode = #tpu.pipeline_mode<synchronous>, transform_indices = @transform_8, window_bounds = array<i64: 1, 128>}, {pipeline_mode = #tpu.pipeline_mode<synchronous>, transform_indices = @transform_9, window_bounds = array<i64: 128, 128>}, {pipeline_mode = #tpu.pipeline_mode<synchronous>, transform_indices = @transform_10, window_bounds = array<i64: 1, 128>}, {transform_indices = @transform_11, window_bounds = array<i64: 8, 128>}]} {
    %c0 = arith.constant 0 : index
    %c0_0 = arith.constant 0 : index
    %0 = vector.load %arg1[%c0, %c0_0] : memref<8x128xbf16, #tpu.memory_space<vmem>>, vector<8x128xbf16>
    %c0_1 = arith.constant 0 : index
    %c0_2 = arith.constant 0 : index
    %1 = vector.load %arg2[%c0_1, %c0_2] : memref<128x128xbf16, #tpu.memory_space<vmem>>, vector<128x128xbf16>
    %cst = arith.constant dense<0.000000e+00> : vector<8x128xf32>
    %2 = tpu.matmul %0, %1, %cst {dimension_numbers = #tpu.dot_dimension_numbers<[1], [0], [0], [1], [0, 0, 1, 1], [], []>} : vector<8x128xbf16>, vector<128x128xbf16>, vector<8x128xf32> -> vector<8x128xf32>
    %c0_3 = arith.constant 0 : index
    %c0_4 = arith.constant 0 : index
    %3 = vector.load %arg3[%c0_3, %c0_4] : memref<1x128xf32, #tpu.memory_space<vmem>>, vector<1x128xf32>
    %4 = vector.broadcast %3 : vector<1x128xf32> to vector<8x128xf32>
    %5 = arith.addf %2, %4 : vector<8x128xf32>
    %cst_5 = arith.constant 0.000000e+00 : f32
    %6 = vector.broadcast %cst_5 : f32 to vector<8x128xf32>
    %7 = arith.maximumf %5, %6 : vector<8x128xf32>
    %8 = arith.truncf %7 : vector<8x128xf32> to vector<8x128xbf16>
    %c0_6 = arith.constant 0 : index
    %c0_7 = arith.constant 0 : index
    %9 = vector.load %arg4[%c0_6, %c0_7] : memref<128x128xbf16, #tpu.memory_space<vmem>>, vector<128x128xbf16>
    %cst_8 = arith.constant dense<0.000000e+00> : vector<8x128xf32>
    %10 = tpu.matmul %8, %9, %cst_8 {dimension_numbers = #tpu.dot_dimension_numbers<[1], [0], [0], [1], [0, 0, 1, 1], [], []>} : vector<8x128xbf16>, vector<128x128xbf16>, vector<8x128xf32> -> vector<8x128xf32>
    %c0_9 = arith.constant 0 : index
    %c0_10 = arith.constant 0 : index
    %11 = vector.load %arg5[%c0_9, %c0_10] : memref<1x128xf32, #tpu.memory_space<vmem>>, vector<1x128xf32>
    %12 = vector.broadcast %11 : vector<1x128xf32> to vector<8x128xf32>
    %13 = arith.addf %10, %12 : vector<8x128xf32>
    %cst_11 = arith.constant 0.000000e+00 : f32
    %14 = vector.broadcast %cst_11 : f32 to vector<8x128xf32>
    %15 = arith.maximumf %13, %14 : vector<8x128xf32>
    %16 = arith.truncf %15 : vector<8x128xf32> to vector<8x128xbf16>
    %c0_12 = arith.constant 0 : index
    %c0_13 = arith.constant 0 : index
    %17 = vector.load %arg6[%c0_12, %c0_13] : memref<128x128xbf16, #tpu.memory_space<vmem>>, vector<128x128xbf16>
    %cst_14 = arith.constant dense<0.000000e+00> : vector<8x128xf32>
    %18 = tpu.matmul %16, %17, %cst_14 {dimension_numbers = #tpu.dot_dimension_numbers<[1], [0], [0], [1], [0, 0, 1, 1], [], []>} : vector<8x128xbf16>, vector<128x128xbf16>, vector<8x128xf32> -> vector<8x128xf32>
    %c0_15 = arith.constant 0 : index
    %c0_16 = arith.constant 0 : index
    %19 = vector.load %arg7[%c0_15, %c0_16] : memref<1x128xf32, #tpu.memory_space<vmem>>, vector<1x128xf32>
    %20 = vector.broadcast %19 : vector<1x128xf32> to vector<8x128xf32>
    %21 = arith.addf %18, %20 : vector<8x128xf32>
    %cst_17 = arith.constant 0.000000e+00 : f32
    %22 = vector.broadcast %cst_17 : f32 to vector<8x128xf32>
    %23 = arith.maximumf %21, %22 : vector<8x128xf32>
    %24 = arith.truncf %23 : vector<8x128xf32> to vector<8x128xbf16>
    %c0_18 = arith.constant 0 : index
    %c0_19 = arith.constant 0 : index
    %25 = vector.load %arg8[%c0_18, %c0_19] : memref<128x128xbf16, #tpu.memory_space<vmem>>, vector<128x128xbf16>
    %cst_20 = arith.constant dense<0.000000e+00> : vector<8x128xf32>
    %26 = tpu.matmul %24, %25, %cst_20 {dimension_numbers = #tpu.dot_dimension_numbers<[1], [0], [0], [1], [0, 0, 1, 1], [], []>} : vector<8x128xbf16>, vector<128x128xbf16>, vector<8x128xf32> -> vector<8x128xf32>
    %c0_21 = arith.constant 0 : index
    %c0_22 = arith.constant 0 : index
    %27 = vector.load %arg9[%c0_21, %c0_22] : memref<1x128xf32, #tpu.memory_space<vmem>>, vector<1x128xf32>
    %28 = vector.broadcast %27 : vector<1x128xf32> to vector<8x128xf32>
    %29 = arith.addf %26, %28 : vector<8x128xf32>
    %cst_23 = arith.constant 0.000000e+00 : f32
    %30 = vector.broadcast %cst_23 : f32 to vector<8x128xf32>
    %31 = arith.maximumf %29, %30 : vector<8x128xf32>
    %32 = arith.truncf %31 : vector<8x128xf32> to vector<8x128xbf16>
    %c0_24 = arith.constant 0 : index
    %c0_25 = arith.constant 0 : index
    %33 = vector.load %arg10[%c0_24, %c0_25] : memref<128x128xbf16, #tpu.memory_space<vmem>>, vector<128x128xbf16>
    %cst_26 = arith.constant dense<0.000000e+00> : vector<8x128xf32>
    %34 = tpu.matmul %32, %33, %cst_26 {dimension_numbers = #tpu.dot_dimension_numbers<[1], [0], [0], [1], [0, 0, 1, 1], [], []>} : vector<8x128xbf16>, vector<128x128xbf16>, vector<8x128xf32> -> vector<8x128xf32>
    %c0_27 = arith.constant 0 : index
    %c0_28 = arith.constant 0 : index
    %35 = vector.load %arg11[%c0_27, %c0_28] : memref<1x128xf32, #tpu.memory_space<vmem>>, vector<1x128xf32>
    %36 = vector.broadcast %35 : vector<1x128xf32> to vector<8x128xf32>
    %37 = arith.addf %34, %36 : vector<8x128xf32>
    %c0_29 = arith.constant 0 : index
    %c0_30 = arith.constant 0 : index
    %38 = vector.load %arg12[%c0_29, %c0_30] : memref<8x128xf32, #tpu.memory_space<vmem>>, vector<8x128xf32>
    tpu.vector_store %arg12[%c0_29, %c0_30], %37 {strides = array<i32>} : memref<8x128xf32, #tpu.memory_space<vmem>>, vector<8x128xf32>,
    return
  }
  func.func @transform_0(%arg0: i32) -> (i32, i32) {
    %c0_i32 = arith.constant 0 : i32
    %c0_i32_0 = arith.constant 0 : i32
    return %arg0, %c0_i32 : i32, i32
  }
  func.func @transform_1(%arg0: i32) -> (i32, i32) {
    %c0_i32 = arith.constant 0 : i32
    %c0_i32_0 = arith.constant 0 : i32
    %c0_i32_1 = arith.constant 0 : i32
    return %c0_i32, %c0_i32_0 : i32, i32
  }
  func.func @transform_2(%arg0: i32) -> (i32, i32) {
    %c0_i32 = arith.constant 0 : i32
    %c0_i32_0 = arith.constant 0 : i32
    %c0_i32_1 = arith.constant 0 : i32
    return %c0_i32, %c0_i32_0 : i32, i32
  }
  func.func @transform_3(%arg0: i32) -> (i32, i32) {
    %c0_i32 = arith.constant 0 : i32
    %c0_i32_0 = arith.constant 0 : i32
    %c0_i32_1 = arith.constant 0 : i32
    return %c0_i32, %c0_i32_0 : i32, i32
  }
  func.func @transform_4(%arg0: i32) -> (i32, i32) {
    %c0_i32 = arith.constant 0 : i32
    %c0_i32_0 = arith.constant 0 : i32
    %c0_i32_1 = arith.constant 0 : i32
    return %c0_i32, %c0_i32_0 : i32, i32
  }
  func.func @transform_5(%arg0: i32) -> (i32, i32) {
    %c0_i32 = arith.constant 0 : i32
    %c0_i32_0 = arith.constant 0 : i32
    %c0_i32_1 = arith.constant 0 : i32
    return %c0_i32, %c0_i32_0 : i32, i32
  }
  func.func @transform_6(%arg0: i32) -> (i32, i32) {
    %c0_i32 = arith.constant 0 : i32
    %c0_i32_0 = arith.constant 0 : i32
    %c0_i32_1 = arith.constant 0 : i32
    return %c0_i32, %c0_i32_0 : i32, i32
  }
  func.func @transform_7(%arg0: i32) -> (i32, i32) {
    %c0_i32 = arith.constant 0 : i32
    %c0_i32_0 = arith.constant 0 : i32
    %c0_i32_1 = arith.constant 0 : i32
    return %c0_i32, %c0_i32_0 : i32, i32
  }
  func.func @transform_8(%arg0: i32) -> (i32, i32) {
    %c0_i32 = arith.constant 0 : i32
    %c0_i32_0 = arith.constant 0 : i32
    %c0_i32_1 = arith.constant 0 : i32
    return %c0_i32, %c0_i32_0 : i32, i32
  }
  func.func @transform_9(%arg0: i32) -> (i32, i32) {
    %c0_i32 = arith.constant 0 : i32
    %c0_i32_0 = arith.constant 0 : i32
    %c0_i32_1 = arith.constant 0 : i32
    return %c0_i32, %c0_i32_0 : i32, i32
  }
  func.func @transform_10(%arg0: i32) -> (i32, i32) {
    %c0_i32 = arith.constant 0 : i32
    %c0_i32_0 = arith.constant 0 : i32
    %c0_i32_1 = arith.constant 0 : i32
    return %c0_i32, %c0_i32_0 : i32, i32
  }
  func.func @transform_11(%arg0: i32) -> (i32, i32) {
    %c0_i32 = arith.constant 0 : i32
    %c0_i32_0 = arith.constant 0 : i32
    return %arg0, %c0_i32 : i32, i32
  }
}

</mosaic_0001>

<llo_original>
// kernel: xk_forward.1
$region0: #{xk_forward.1}
  #allocation0 [shape = 'u32[]', space=smem, size = 0x4, offset = 0x4, fixed_abs, tag = 'smem constant byte address 0x4 - core index']
  #allocation1 [shape = 'u32[144,128]{1,0:T(1,128)}', space=vmem, size = 0x12000, scoped, tag = 'internal scratch']
  %s0 = inlined_call_operand.vmem [shape: bf16[8,128], index: 0, kind: input, shape index: {}]
  %s1 = inlined_call_operand.vmem [shape: bf16[128,128], index: 1, kind: input, shape index: {}]
  %s2 = inlined_call_operand.vmem [shape: f32[1,128], index: 2, kind: input, shape index: {}]
  %s3 = inlined_call_operand.vmem [shape: bf16[128,128], index: 3, kind: input, shape index: {}]
  %s4 = inlined_call_operand.vmem [shape: f32[1,128], index: 4, kind: input, shape index: {}]
  %s5 = inlined_call_operand.vmem [shape: bf16[128,128], index: 5, kind: input, shape index: {}]
  %s6 = inlined_call_operand.vmem [shape: f32[1,128], index: 6, kind: input, shape index: {}]
  %s7 = inlined_call_operand.vmem [shape: bf16[128,128], index: 7, kind: input, shape index: {}]
  %s8 = inlined_call_operand.vmem [shape: f32[1,128], index: 8, kind: input, shape index: {}]
  %s9 = inlined_call_operand.vmem [shape: bf16[128,128], index: 9, kind: input, shape index: {}]
  %s10 = inlined_call_operand.vmem [shape: f32[1,128], index: 10, kind: input, shape index: {}]
  %s11 = inlined_call_operand.vmem [shape: f32[8,128], index: 11, kind: output, shape index: {}]
  %s12 = sld [smem:[#allocation0]]
  $region54: #{xk_forward.1} parent=0
    _
  %s14 = ssub.s32 1, %s12
  %s15 = scalar_select 0, %s14, %s12
  // Predicated region
  $region2: #{xk_forward.1} parent=0 // pred_check
    _
  $region3: #{xk_forward.1} parent=0 // pred_check_branch
    %17 = sbr.rel (0) target = $region5
  $region4: #{xk_forward.1} parent=0 // pred_region
    _
  $region5: #{xk_forward.1} parent=0 // pred_fallthru
    _
  // Predicated region
  $region6: #{xk_forward.1} parent=0 // pred_check
    _
  $region7: #{xk_forward.1} parent=0 // pred_check_branch
    %19 = sbr.rel (0) target = $region9
  $region8: #{xk_forward.1} parent=0 // pred_region
    _
  $region9: #{xk_forward.1} parent=0 // pred_fallthru
    _
  // Predicated region
  $region10: #{xk_forward.1} parent=0 // pred_check
    _
  $region11: #{xk_forward.1} parent=0 // pred_check_branch
    %21 = sbr.rel (0) target = $region13
  $region12: #{xk_forward.1} parent=0 // pred_region
    _
  $region13: #{xk_forward.1} parent=0 // pred_fallthru
    _
  // Predicated region
  $region14: #{xk_forward.1} parent=0 // pred_check
    _
  $region15: #{xk_forward.1} parent=0 // pred_check_branch
    %23 = sbr.rel (0) target = $region17
  $region16: #{xk_forward.1} parent=0 // pred_region
    _
  $region17: #{xk_forward.1} parent=0 // pred_fallthru
    _
  // Predicated region
  $region18: #{xk_forward.1} parent=0 // pred_check
    _
  $region19: #{xk_forward.1} parent=0 // pred_check_branch
    %25 = sbr.rel (0) target = $region21
  $region20: #{xk_forward.1} parent=0 // pred_region
    _
  $region21: #{xk_forward.1} parent=0 // pred_fallthru
    _
  // Predicated region
  $region22: #{xk_forward.1} parent=0 // pred_check
    _
  $region23: #{xk_forward.1} parent=0 // pred_check_branch
    %27 = sbr.rel (0) target = $region25
  $region24: #{xk_forward.1} parent=0 // pred_region
    _
  $region25: #{xk_forward.1} parent=0 // pred_fallthru
    _
  // Predicated region
  $region26: #{xk_forward.1} parent=0 // pred_check
    _
  $region27: #{xk_forward.1} parent=0 // pred_check_branch
    %29 = sbr.rel (0) target = $region29
  $region28: #{xk_forward.1} parent=0 // pred_region
    _
  $region29: #{xk_forward.1} parent=0 // pred_fallthru
    _
  // Predicated region
  $region30: #{xk_forward.1} parent=0 // pred_check
    _
  $region31: #{xk_forward.1} parent=0 // pred_check_branch
    %31 = sbr.rel (0) target = $region33
  $region32: #{xk_forward.1} parent=0 // pred_region
    _
  $region33: #{xk_forward.1} parent=0 // pred_fallthru
    _
  // Predicated region
  $region34: #{xk_forward.1} parent=0 // pred_check
    _
  $region35: #{xk_forward.1} parent=0 // pred_check_branch
    %33 = sbr.rel (0) target = $region37
  $region36: #{xk_forward.1} parent=0 // pred_region
    _
  $region37: #{xk_forward.1} parent=0 // pred_fallthru
    _
  // Predicated region
  $region38: #{xk_forward.1} parent=0 // pred_check
    _
  $region39: #{xk_forward.1} parent=0 // pred_check_branch
    %35 = sbr.rel (0) target = $region41
  $region40: #{xk_forward.1} parent=0 // pred_region
    _
  $region41: #{xk_forward.1} parent=0 // pred_fallthru
    _
  // Predicated region
  $region42: #{xk_forward.1} parent=0 // pred_check
    _
  $region43: #{xk_forward.1} parent=0 // pred_check_branch
    %37 = sbr.rel (0) target = $region45
  $region44: #{xk_forward.1} parent=0 // pred_region
    _
  $region45: #{xk_forward.1} parent=0 // pred_fallthru
    _
  %v39 = vld [vmem:[%s0] sm:$0xf]
  %v40 = vld [vmem:[%s1] sm:$0xf]
  %v41 = vld [vmem:[%s1 + $0x4] sm:$0xf]
  %v42 = vld [vmem:[%s1 + $0x8] sm:$0xf]
  %v43 = vld [vmem:[%s1 + $0xc] sm:$0xf]
  %v44 = vld [vmem:[%s1 + $0x10] sm:$0xf]
  %v45 = vld [vmem:[%s1 + $0x14] sm:$0xf]
  %v46 = vld [vmem:[%s1 + $0x18] sm:$0xf]
  %v47 = vld [vmem:[%s1 + $0x1c] sm:$0xf]
  %v48 = vld [vmem:[%s1 + $0x20] sm:$0xf]
  %v49 = vld [vmem:[%s1 + $0x24] sm:$0xf]
  %v50 = vld [vmem:[%s1 + $0x28] sm:$0xf]
  %v51 = vld [vmem:[%s1 + $0x2c] sm:$0xf]
  %v52 = vld [vmem:[%s1 + $0x30] sm:$0xf]
  %v53 = vld [vmem:[%s1 + $0x34] sm:$0xf]
  %v54 = vld [vmem:[%s1 + $0x38] sm:$0xf]
  %v55 = vld [vmem:[%s1 + $0x3c] sm:$0xf]
  %v56 = vld [vmem:[%s2] sm:$0x1]
  %v58 = vlaneseq
  %v59 = vshrl.u32 %v58, 7
  %v60 = vsub.s32 0, %v59
  %v61 = vrot.slane %v56, %v60
  %v79 = vunpack.c.l.b16 %v40
  %v80 = vunpack.c.l.b16 %v41
  %v81 = vunpack.c.l.b16 %v42
  %v82 = vunpack.c.l.b16 %v43
  %v83 = vunpack.c.l.b16 %v44
  %v84 = vunpack.c.l.b16 %v45
  %v85 = vunpack.c.l.b16 %v46
  %v86 = vunpack.c.l.b16 %v47
  %v87 = vunpack.c.l.b16 %v48
  %v88 = vunpack.c.l.b16 %v49
  %v89 = vunpack.c.l.b16 %v50
  %v90 = vunpack.c.l.b16 %v51
  %v91 = vunpack.c.l.b16 %v52
  %v92 = vunpack.c.l.b16 %v53
  %v93 = vunpack.c.l.b16 %v54
  %v94 = vunpack.c.l.b16 %v55
  %v95 = vpack.c.b16 %v80, %v79
  %v96 = vpack.c.b16 %v82, %v81
  %v97 = vpack.c.b16 %v84, %v83
  %v98 = vpack.c.b16 %v86, %v85
  %v99 = vpack.c.b16 %v88, %v87
  %v100 = vpack.c.b16 %v90, %v89
  %v101 = vpack.c.b16 %v92, %v91
  %v102 = vpack.c.b16 %v94, %v93
  %111 = vmatprep.subr.bf16.mxu0 0
  %112 = vmatpush1.bf16.msra.mxu0 %v95
  %113 = vmatprep.subr.bf16.mxu0 0
  %114 = vmatpush1.bf16.msra.mxu0 %v96
  %115 = vmatprep.subr.bf16.mxu0 0
  %116 = vmatpush1.bf16.msra.mxu0 %v97
  %117 = vmatprep.subr.bf16.mxu0 0
  %118 = vmatpush1.bf16.msra.mxu0 %v98
  %119 = vmatprep.subr.bf16.mxu0 0
  %120 = vmatpush1.bf16.msra.mxu0 %v99
  %121 = vmatprep.subr.bf16.mxu0 0
  %122 = vmatpush1.bf16.msra.mxu0 %v100
  %123 = vmatprep.subr.bf16.mxu0 0
  %124 = vmatpush1.bf16.msra.mxu0 %v101
  %125 = vmatprep.subr.bf16.mxu0 0
  %126 = vmatpush1.bf16.msra.mxu0 %v102
  %127 = vmatprep.subr.bf16.mxu0 0
  %128 = vmatpush1.bf16.msra.mxu0 0
  %129 = vmatprep.subr.bf16.mxu0 0
  %130 = vmatpush1.bf16.msra.mxu0 0
  %131 = vmatprep.subr.bf16.mxu0 0
  %132 = vmatpush1.bf16.msra.mxu0 0
  %133 = vmatprep.subr.bf16.mxu0 0
  %134 = vmatpush1.bf16.msra.mxu0 0
  %135 = vmatprep.subr.bf16.mxu0 0
  %136 = vmatpush1.bf16.msra.mxu0 0
  %137 = vmatprep.subr.bf16.mxu0 0
  %138 = vmatpush1.bf16.msra.mxu0 0
  %139 = vmatprep.subr.bf16.mxu0 0
  %140 = vmatpush1.bf16.msra.mxu0 0
  %141 = vmatprep.subr.bf16.mxu0 0
  %142 = vmatpush1.bf16.msra.mxu0 0
  %143 = vmatprep.mubr.bf16.mxu0 0
  %144 = vmatmul.mubr.bf16.gmra.mrb[0].mxu0 %v39
  %v145 = vpop.f32.mrb[0].mxu0
  %v146 = vadd.f32 %v61, %v145
  %v147 = vpop.f32.mrb[0].mxu0
  %v148 = vpop.f32.mrb[0].mxu0
  %v149 = vpop.f32.mrb[0].mxu0
  %150 = vdwg.mxu0
  %v151 = vmax.f32 %v146, 0.0
  %v152 = vpack.c.bf16 %v151, %v151
  %v153 = vld [vmem:[%s3] sm:$0xf]
  %v154 = vld [vmem:[%s3 + $0x4] sm:$0xf]
  %v155 = vld [vmem:[%s3 + $0x8] sm:$0xf]
  %v156 = vld [vmem:[%s3 + $0xc] sm:$0xf]
  %v157 = vld [vmem:[%s3 + $0x10] sm:$0xf]
  %v158 = vld [vmem:[%s3 + $0x14] sm:$0xf]
  %v159 = vld [vmem:[%s3 + $0x18] sm:$0xf]
  %v160 = vld [vmem:[%s3 + $0x1c] sm:$0xf]
  %v161 = vld [vmem:[%s3 + $0x20] sm:$0xf]
  %v162 = vld [vmem:[%s3 + $0x24] sm:$0xf]
  %v163 = vld [vmem:[%s3 + $0x28] sm:$0xf]
  %v164 = vld [vmem:[%s3 + $0x2c] sm:$0xf]
  %v165 = vld [vmem:[%s3 + $0x30] sm:$0xf]
  %v166 = vld [vmem:[%s3 + $0x34] sm:$0xf]
  %v167 = vld [vmem:[%s3 + $0x38] sm:$0xf]
  %v168 = vld [vmem:[%s3 + $0x3c] sm:$0xf]
  %v169 = vld [vmem:[%s4] sm:$0x1]
  %v171 = vlaneseq
  %v172 = vshrl.u32 %v171, 7
  %v173 = vsub.s32 0, %v172
  %v174 = vrot.slane %v169, %v173
  %v192 = vunpack.c.l.b16 %v153
  %v193 = vunpack.c.l.b16 %v154
  %v194 = vunpack.c.l.b16 %v155
  %v195 = vunpack.c.l.b16 %v156
  %v196 = vunpack.c.l.b16 %v157
  %v197 = vunpack.c.l.b16 %v158
  %v198 = vunpack.c.l.b16 %v159
  %v199 = vunpack.c.l.b16 %v160
  %v200 = vunpack.c.l.b16 %v161
  %v201 = vunpack.c.l.b16 %v162
  %v202 = vunpack.c.l.b16 %v163
  %v203 = vunpack.c.l.b16 %v164
  %v204 = vunpack.c.l.b16 %v165
  %v205 = vunpack.c.l.b16 %v166
  %v206 = vunpack.c.l.b16 %v167
  %v207 = vunpack.c.l.b16 %v168
  %v208 = vpack.c.b16 %v193, %v192
  %v209 = vpack.c.b16 %v195, %v194
  %v210 = vpack.c.b16 %v197, %v196
  %v211 = vpack.c.b16 %v199, %v198
  %v212 = vpack.c.b16 %v201, %v200
  %v213 = vpack.c.b16 %v203, %v202
  %v214 = vpack.c.b16 %v205, %v204
  %v215 = vpack.c.b16 %v207, %v206
  %224 = vmatprep.subr.bf16.mxu0 0
  %225 = vmatpush1.bf16.msra.mxu0 %v208
  %226 = vmatprep.subr.bf16.mxu0 0
  %227 = vmatpush1.bf16.msra.mxu0 %v209
  %228 = vmatprep.subr.bf16.mxu0 0
  %229 = vmatpush1.bf16.msra.mxu0 %v210
  %230 = vmatprep.subr.bf16.mxu0 0
  %231 = vmatpush1.bf16.msra.mxu0 %v211
  %232 = vmatprep.subr.bf16.mxu0 0
  %233 = vmatpush1.bf16.msra.mxu0 %v212
  %234 = vmatprep.subr.bf16.mxu0 0
  %235 = vmatpush1.bf16.msra.mxu0 %v213
  %236 = vmatprep.subr.bf16.mxu0 0
  %237 = vmatpush1.bf16.msra.mxu0 %v214
  %238 = vmatprep.subr.bf16.mxu0 0
  %239 = vmatpush1.bf16.msra.mxu0 %v215
  %240 = vmatprep.subr.bf16.mxu0 0
  %241 = vmatpush1.bf16.msra.mxu0 0
  %242 = vmatprep.subr.bf16.mxu0 0
  %243 = vmatpush1.bf16.msra.mxu0 0
  %244 = vmatprep.subr.bf16.mxu0 0
  %245 = vmatpush1.bf16.msra.mxu0 0
  %246 = vmatprep.subr.bf16.mxu0 0
  %247 = vmatpush1.bf16.msra.mxu0 0
  %248 = vmatprep.subr.bf16.mxu0 0
  %249 = vmatpush1.bf16.msra.mxu0 0
  %250 = vmatprep.subr.bf16.mxu0 0
  %251 = vmatpush1.bf16.msra.mxu0 0
  %252 = vmatprep.subr.bf16.mxu0 0
  %253 = vmatpush1.bf16.msra.mxu0 0
  %254 = vmatprep.subr.bf16.mxu0 0
  %255 = vmatpush1.bf16.msra.mxu0 0
  %256 = vmatprep.mubr.bf16.mxu0 0
  %257 = vmatmul.mubr.bf16.gmra.mrb[0].mxu0 %v152
  %v258 = vpop.f32.mrb[0].mxu0
  %v259 = vadd.f32 %v174, %v258
  %v260 = vpop.f32.mrb[0].mxu0
  %v261 = vpop.f32.mrb[0].mxu0
  %v262 = vpop.f32.mrb[0].mxu0
  %263 = vdwg.mxu0
  %v264 = vmax.f32 %v259, 0.0
  %v265 = vpack.c.bf16 %v264, %v264
  %v266 = vld [vmem:[%s5] sm:$0xf]
  %v267 = vld [vmem:[%s5 + $0x4] sm:$0xf]
  %v268 = vld [vmem:[%s5 + $0x8] sm:$0xf]
  %v269 = vld [vmem:[%s5 + $0xc] sm:$0xf]
  %v270 = vld [vmem:[%s5 + $0x10] sm:$0xf]
  %v271 = vld [vmem:[%s5 + $0x14] sm:$0xf]
  %v272 = vld [vmem:[%s5 + $0x18] sm:$0xf]
  %v273 = vld [vmem:[%s5 + $0x1c] sm:$0xf]
  %v274 = vld [vmem:[%s5 + $0x20] sm:$0xf]
  %v275 = vld [vmem:[%s5 + $0x24] sm:$0xf]
  %v276 = vld [vmem:[%s5 + $0x28] sm:$0xf]
  %v277 = vld [vmem:[%s5 + $0x2c] sm:$0xf]
  %v278 = vld [vmem:[%s5 + $0x30] sm:$0xf]
  %v279 = vld [vmem:[%s5 + $0x34] sm:$0xf]
  %v280 = vld [vmem:[%s5 + $0x38] sm:$0xf]
  %v281 = vld [vmem:[%s5 + $0x3c] sm:$0xf]
  %v282 = vld [vmem:[%s6] sm:$0x1]
  %v284 = vlaneseq
  %v285 = vshrl.u32 %v284, 7
  %v286 = vsub.s32 0, %v285
  %v287 = vrot.slane %v282, %v286
  %v305 = vunpack.c.l.b16 %v266
  %v306 = vunpack.c.l.b16 %v267
  %v307 = vunpack.c.l.b16 %v268
  %v308 = vunpack.c.l.b16 %v269
  %v309 = vunpack.c.l.b16 %v270
  %v310 = vunpack.c.l.b16 %v271
  %v311 = vunpack.c.l.b16 %v272
  %v312 = vunpack.c.l.b16 %v273
  %v313 = vunpack.c.l.b16 %v274
  %v314 = vunpack.c.l.b16 %v275
  %v315 = vunpack.c.l.b16 %v276
  %v316 = vunpack.c.l.b16 %v277
  %v317 = vunpack.c.l.b16 %v278
  %v318 = vunpack.c.l.b16 %v279
  %v319 = vunpack.c.l.b16 %v280
  %v320 = vunpack.c.l.b16 %v281
  %v321 = vpack.c.b16 %v306, %v305
  %v322 = vpack.c.b16 %v308, %v307
  %v323 = vpack.c.b16 %v310, %v309
  %v324 = vpack.c.b16 %v312, %v311
  %v325 = vpack.c.b16 %v314, %v313
  %v326 = vpack.c.b16 %v316, %v315
  %v327 = vpack.c.b16 %v318, %v317
  %v328 = vpack.c.b16 %v320, %v319
  %337 = vmatprep.subr.bf16.mxu0 0
  %338 = vmatpush1.bf16.msra.mxu0 %v321
  %339 = vmatprep.subr.bf16.mxu0 0
  %340 = vmatpush1.bf16.msra.mxu0 %v322
  %341 = vmatprep.subr.bf16.mxu0 0
  %342 = vmatpush1.bf16.msra.mxu0 %v323
  %343 = vmatprep.subr.bf16.mxu0 0
  %344 = vmatpush1.bf16.msra.mxu0 %v324
  %345 = vmatprep.subr.bf16.mxu0 0
  %346 = vmatpush1.bf16.msra.mxu0 %v325
  %347 = vmatprep.subr.bf16.mxu0 0
  %348 = vmatpush1.bf16.msra.mxu0 %v326
  %349 = vmatprep.subr.bf16.mxu0 0
  %350 = vmatpush1.bf16.msra.mxu0 %v327
  %351 = vmatprep.subr.bf16.mxu0 0
  %352 = vmatpush1.bf16.msra.mxu0 %v328
  %353 = vmatprep.subr.bf16.mxu0 0
  %354 = vmatpush1.bf16.msra.mxu0 0
  %355 = vmatprep.subr.bf16.mxu0 0
  %356 = vmatpush1.bf16.msra.mxu0 0
  %357 = vmatprep.subr.bf16.mxu0 0
  %358 = vmatpush1.bf16.msra.mxu0 0
  %359 = vmatprep.subr.bf16.mxu0 0
  %360 = vmatpush1.bf16.msra.mxu0 0
  %361 = vmatprep.subr.bf16.mxu0 0
  %362 = vmatpush1.bf16.msra.mxu0 0
  %363 = vmatprep.subr.bf16.mxu0 0
  %364 = vmatpush1.bf16.msra.mxu0 0
  %365 = vmatprep.subr.bf16.mxu0 0
  %366 = vmatpush1.bf16.msra.mxu0 0
  %367 = vmatprep.subr.bf16.mxu0 0
  %368 = vmatpush1.bf16.msra.mxu0 0
  %369 = vmatprep.mubr.bf16.mxu0 0
  %370 = vmatmul.mubr.bf16.gmra.mrb[0].mxu0 %v265
  %v371 = vpop.f32.mrb[0].mxu0
  %v372 = vadd.f32 %v287, %v371
  %v373 = vpop.f32.mrb[0].mxu0
  %v374 = vpop.f32.mrb[0].mxu0
  %v375 = vpop.f32.mrb[0].mxu0
  %376 = vdwg.mxu0
  %v377 = vmax.f32 %v372, 0.0
  %v378 = vpack.c.bf16 %v377, %v377
  %v379 = vld [vmem:[%s7] sm:$0xf]
  %v380 = vld [vmem:[%s7 + $0x4] sm:$0xf]
  %v381 = vld [vmem:[%s7 + $0x8] sm:$0xf]
  %v382 = vld [vmem:[%s7 + $0xc] sm:$0xf]
  %v383 = vld [vmem:[%s7 + $0x10] sm:$0xf]
  %v384 = vld [vmem:[%s7 + $0x14] sm:$0xf]
  %v385 = vld [vmem:[%s7 + $0x18] sm:$0xf]
  %v386 = vld [vmem:[%s7 + $0x1c] sm:$0xf]
  %v387 = vld [vmem:[%s7 + $0x20] sm:$0xf]
  %v388 = vld [vmem:[%s7 + $0x24] sm:$0xf]
  %v389 = vld [vmem:[%s7 + $0x28] sm:$0xf]
  %v390 = vld [vmem:[%s7 + $0x2c] sm:$0xf]
  %v391 = vld [vmem:[%s7 + $0x30] sm:$0xf]
  %v392 = vld [vmem:[%s7 + $0x34] sm:$0xf]
  %v393 = vld [vmem:[%s7 + $0x38] sm:$0xf]
  %v394 = vld [vmem:[%s7 + $0x3c] sm:$0xf]
  %v395 = vld [vmem:[%s8] sm:$0x1]
  %v397 = vlaneseq
  %v398 = vshrl.u32 %v397, 7
  %v399 = vsub.s32 0, %v398
  %v400 = vrot.slane %v395, %v399
  %v418 = vunpack.c.l.b16 %v379
  %v419 = vunpack.c.l.b16 %v380
  %v420 = vunpack.c.l.b16 %v381
  %v421 = vunpack.c.l.b16 %v382
  %v422 = vunpack.c.l.b16 %v383
  %v423 = vunpack.c.l.b16 %v384
  %v424 = vunpack.c.l.b16 %v385
  %v425 = vunpack.c.l.b16 %v386
  %v426 = vunpack.c.l.b16 %v387
  %v427 = vunpack.c.l.b16 %v388
  %v428 = vunpack.c.l.b16 %v389
  %v429 = vunpack.c.l.b16 %v390
  %v430 = vunpack.c.l.b16 %v391
  %v431 = vunpack.c.l.b16 %v392
  %v432 = vunpack.c.l.b16 %v393
  %v433 = vunpack.c.l.b16 %v394
  %v434 = vpack.c.b16 %v419, %v418
  %v435 = vpack.c.b16 %v421, %v420
  %v436 = vpack.c.b16 %v423, %v422
  %v437 = vpack.c.b16 %v425, %v424
  %v438 = vpack.c.b16 %v427, %v426
  %v439 = vpack.c.b16 %v429, %v428
  %v440 = vpack.c.b16 %v431, %v430
  %v441 = vpack.c.b16 %v433, %v432
  %450 = vmatprep.subr.bf16.mxu0 0
  %451 = vmatpush1.bf16.msra.mxu0 %v434
  %452 = vmatprep.subr.bf16.mxu0 0
  %453 = vmatpush1.bf16.msra.mxu0 %v435
  %454 = vmatprep.subr.bf16.mxu0 0
  %455 = vmatpush1.bf16.msra.mxu0 %v436
  %456 = vmatprep.subr.bf16.mxu0 0
  %457 = vmatpush1.bf16.msra.mxu0 %v437
  %458 = vmatprep.subr.bf16.mxu0 0
  %459 = vmatpush1.bf16.msra.mxu0 %v438
  %460 = vmatprep.subr.bf16.mxu0 0
  %461 = vmatpush1.bf16.msra.mxu0 %v439
  %462 = vmatprep.subr.bf16.mxu0 0
  %463 = vmatpush1.bf16.msra.mxu0 %v440
  %464 = vmatprep.subr.bf16.mxu0 0
  %465 = vmatpush1.bf16.msra.mxu0 %v441
  %466 = vmatprep.subr.bf16.mxu0 0
  %467 = vmatpush1.bf16.msra.mxu0 0
  %468 = vmatprep.subr.bf16.mxu0 0
  %469 = vmatpush1.bf16.msra.mxu0 0
  %470 = vmatprep.subr.bf16.mxu0 0
  %471 = vmatpush1.bf16.msra.mxu0 0
  %472 = vmatprep.subr.bf16.mxu0 0
  %473 = vmatpush1.bf16.msra.mxu0 0
  %474 = vmatprep.subr.bf16.mxu0 0
  %475 = vmatpush1.bf16.msra.mxu0 0
  %476 = vmatprep.subr.bf16.mxu0 0
  %477 = vmatpush1.bf16.msra.mxu0 0
  %478 = vmatprep.subr.bf16.mxu0 0
  %479 = vmatpush1.bf16.msra.mxu0 0
  %480 = vmatprep.subr.bf16.mxu0 0
  %481 = vmatpush1.bf16.msra.mxu0 0
  %482 = vmatprep.mubr.bf16.mxu0 0
  %483 = vmatmul.mubr.bf16.gmra.mrb[0].mxu0 %v378
  %v484 = vpop.f32.mrb[0].mxu0
  %v485 = vadd.f32 %v400, %v484
  %v486 = vpop.f32.mrb[0].mxu0
  %v487 = vpop.f32.mrb[0].mxu0
  %v488 = vpop.f32.mrb[0].mxu0
  %489 = vdwg.mxu0
  %v490 = vmax.f32 %v485, 0.0
  %v491 = vpack.c.bf16 %v490, %v490
  %v492 = vld [vmem:[%s9] sm:$0xf]
  %v493 = vld [vmem:[%s9 + $0x4] sm:$0xf]
  %v494 = vld [vmem:[%s9 + $0x8] sm:$0xf]
  %v495 = vld [vmem:[%s9 + $0xc] sm:$0xf]
  %v496 = vld [vmem:[%s9 + $0x10] sm:$0xf]
  %v497 = vld [vmem:[%s9 + $0x14] sm:$0xf]
  %v498 = vld [vmem:[%s9 + $0x18] sm:$0xf]
  %v499 = vld [vmem:[%s9 + $0x1c] sm:$0xf]
  %v500 = vld [vmem:[%s9 + $0x20] sm:$0xf]
  %v501 = vld [vmem:[%s9 + $0x24] sm:$0xf]
  %v502 = vld [vmem:[%s9 + $0x28] sm:$0xf]
  %v503 = vld [vmem:[%s9 + $0x2c] sm:$0xf]
  %v504 = vld [vmem:[%s9 + $0x30] sm:$0xf]
  %v505 = vld [vmem:[%s9 + $0x34] sm:$0xf]
  %v506 = vld [vmem:[%s9 + $0x38] sm:$0xf]
  %v507 = vld [vmem:[%s9 + $0x3c] sm:$0xf]
  %v508 = vld [vmem:[%s10] sm:$0x1]
  %v510 = vlaneseq
  %v511 = vshrl.u32 %v510, 7
  %v512 = vsub.s32 0, %v511
  %v513 = vrot.slane %v508, %v512
  %v531 = vunpack.c.l.b16 %v492
  %v532 = vunpack.c.l.b16 %v493
  %v533 = vunpack.c.l.b16 %v494
  %v534 = vunpack.c.l.b16 %v495
  %v535 = vunpack.c.l.b16 %v496
  %v536 = vunpack.c.l.b16 %v497
  %v537 = vunpack.c.l.b16 %v498
  %v538 = vunpack.c.l.b16 %v499
  %v539 = vunpack.c.l.b16 %v500
  %v540 = vunpack.c.l.b16 %v501
  %v541 = vunpack.c.l.b16 %v502
  %v542 = vunpack.c.l.b16 %v503
  %v543 = vunpack.c.l.b16 %v504
  %v544 = vunpack.c.l.b16 %v505
  %v545 = vunpack.c.l.b16 %v506
  %v546 = vunpack.c.l.b16 %v507
  %v547 = vpack.c.b16 %v532, %v531
  %v548 = vpack.c.b16 %v534, %v533
  %v549 = vpack.c.b16 %v536, %v535
  %v550 = vpack.c.b16 %v538, %v537
  %v551 = vpack.c.b16 %v540, %v539
  %v552 = vpack.c.b16 %v542, %v541
  %v553 = vpack.c.b16 %v544, %v543
  %v554 = vpack.c.b16 %v546, %v545
  %563 = vmatprep.subr.bf16.mxu0 0
  %564 = vmatpush1.bf16.msra.mxu0 %v547
  %565 = vmatprep.subr.bf16.mxu0 0
  %566 = vmatpush1.bf16.msra.mxu0 %v548
  %567 = vmatprep.subr.bf16.mxu0 0
  %568 = vmatpush1.bf16.msra.mxu0 %v549
  %569 = vmatprep.subr.bf16.mxu0 0
  %570 = vmatpush1.bf16.msra.mxu0 %v550
  %571 = vmatprep.subr.bf16.mxu0 0
  %572 = vmatpush1.bf16.msra.mxu0 %v551
  %573 = vmatprep.subr.bf16.mxu0 0
  %574 = vmatpush1.bf16.msra.mxu0 %v552
  %575 = vmatprep.subr.bf16.mxu0 0
  %576 = vmatpush1.bf16.msra.mxu0 %v553
  %577 = vmatprep.subr.bf16.mxu0 0
  %578 = vmatpush1.bf16.msra.mxu0 %v554
  %579 = vmatprep.subr.bf16.mxu0 0
  %580 = vmatpush1.bf16.msra.mxu0 0
  %581 = vmatprep.subr.bf16.mxu0 0
  %582 = vmatpush1.bf16.msra.mxu0 0
  %583 = vmatprep.subr.bf16.mxu0 0
  %584 = vmatpush1.bf16.msra.mxu0 0
  %585 = vmatprep.subr.bf16.mxu0 0
  %586 = vmatpush1.bf16.msra.mxu0 0
  %587 = vmatprep.subr.bf16.mxu0 0
  %588 = vmatpush1.bf16.msra.mxu0 0
  %589 = vmatprep.subr.bf16.mxu0 0
  %590 = vmatpush1.bf16.msra.mxu0 0
  %591 = vmatprep.subr.bf16.mxu0 0
  %592 = vmatpush1.bf16.msra.mxu0 0
  %593 = vmatprep.subr.bf16.mxu0 0
  %594 = vmatpush1.bf16.msra.mxu0 0
  %595 = vmatprep.mubr.bf16.mxu0 0
  %596 = vmatmul.mubr.bf16.gmra.mrb[0].mxu0 %v491
  %v597 = vpop.f32.mrb[0].mxu0
  %v598 = vadd.f32 %v513, %v597
  %v599 = vpop.f32.mrb[0].mxu0
  %v600 = vpop.f32.mrb[0].mxu0
  %v601 = vpop.f32.mrb[0].mxu0
  %602 = vdwg.mxu0
  %603 = vst [vmem:[%s11] sm:$0xff] %v598
  // Predicated region
  $region46: #{xk_forward.1} parent=0 // pred_check
    _
  $region47: #{xk_forward.1} parent=0 // pred_check_branch
    %605 = sbr.rel (0) target = $region49
  $region48: #{xk_forward.1} parent=0 // pred_region
    _
  $region49: #{xk_forward.1} parent=0 // pred_fallthru
    _
  // Predicated region
  $region50: #{xk_forward.1} parent=0 // pred_check
    _
  $region51: #{xk_forward.1} parent=0 // pred_check_branch
    %607 = sbr.rel (0) target = $region53
  $region52: #{xk_forward.1} parent=0 // pred_region
    _
  $region53: #{xk_forward.1} parent=0 // pred_fallthru
    _

</llo_original>
